<compile_context>
chip_gen: v7x
topology: tpu7x:2x2x1
jax: 0.10.0
libtpu: 0.0.40
codegen_flags: <defaults>
</compile_context>

<pallas_src>
import math
import functools

import jax
import jax.numpy as jnp
from jax.experimental import pallas as pl
from jax.experimental.pallas import tpu as pltpu


# ---------------------------------------------------------------------------
# Kernels
# ---------------------------------------------------------------------------
def _add_pe_kernel(x_ref, pe_ref, o_ref):
    # Eval mode: out = x + pe (pe broadcasts over the batch / leading dim).
    o_ref[...] = x_ref[...] + pe_ref[...]


def _add_pe_dropout_kernel(x_ref, pe_ref, bits_ref, o_ref, *, threshold, scale):
    # Train mode, inverted dropout in the integer domain:
    #   keep <=> bits < (1-p) * 2^32 ;  out = keep ? (x + pe) * 1/(1-p) : 0
    y = x_ref[...] + pe_ref[...]
    keep = bits_ref[...] < jnp.asarray(threshold, dtype=jnp.uint32)
    o_ref[...] = jnp.where(keep, y * jnp.asarray(scale, dtype=y.dtype),
                           jnp.zeros_like(y))


# ---------------------------------------------------------------------------
# Parameter setup (mirrors the PyTorch __init__, deterministic, no files)
# ---------------------------------------------------------------------------
def make_positional_encoding_table(max_len, d_model, dtype=jnp.float32):
    if d_model % 2 != 0:
        raise ValueError("d_model must be even (same constraint as the PyTorch module).")
    position = jnp.arange(0.0, max_len, dtype=jnp.float32)[:, None]            # (max_len, 1)
    div_term = jnp.exp(
        jnp.arange(0.0, d_model, 2, dtype=jnp.float32) * -(math.log(10000.0) / d_model)
    )                                                                           # (d_model//2,)
    args = position * div_term                                                  # (max_len, d_model//2)
    pe = jnp.zeros((max_len, d_model), jnp.float32)
    pe = pe.at[:, 0::2].set(jnp.sin(args))
    pe = pe.at[:, 1::2].set(jnp.cos(args))
    return pe.astype(dtype)


# ---------------------------------------------------------------------------
# Wrapper
# ---------------------------------------------------------------------------
_TARGET_BLOCK_BYTES = 1 << 20   # ~1 MiB per block: safe w.r.t. default scoped VMEM on v5e/v6e/v7x


def positional_encoding(x, pe, dropout_p=0.0, key=None):
    """dropout(x + pe[:seq_len]) for x of shape (batch, seq_len, d_model)."""
    batch, seq_len, d_model = x.shape
    itemsize = jnp.dtype(x.dtype).itemsize
    # Compute in x's dtype (bf16 stays bf16 on v6e/v7x; f32 stays f32 everywhere).
    pe_slice = pe[:seq_len, :].astype(x.dtype)
    target_elems = max(128, _TARGET_BLOCK_BYTES // itemsize)

    if d_model < 128:
        # Lane-dense path: flatten (seq_len, d_model) into one lane axis, tile it in
        # multiples of 128; pe (1, T) broadcasts over the batch sublanes in-kernel.
        flat = seq_len * d_model
        xk = x.reshape(batch, flat)
        pek = pe_slice.reshape(1, flat)
        t_lanes = max(128, (target_elems // max(batch, 1)) // 128 * 128)
        tile = min(flat, t_lanes)
        grid = (pl.cdiv(flat, tile),)
        x_spec = pl.BlockSpec((batch, tile), lambda t: (0, t))
        pe_spec = pl.BlockSpec((1, tile), lambda t: (0, t))
        out_shape = jax.ShapeDtypeStruct((batch, flat), x.dtype)
        dims = ("parallel",)
    else:
        # d_model already fills the lanes; tile the sequence axis.  Batch is the innermost
        # grid axis and pe's index_map ignores it -> pe tile DMA'd once per seq tile.
        ts = min(seq_len, max(8, (target_elems // d_model) // 8 * 8))
        xk = x
        pek = pe_slice[None]                              # (1, seq_len, d_model)
        grid = (pl.cdiv(seq_len, ts), batch)
        x_spec = pl.BlockSpec((1, ts, d_model), lambda t, b: (b, t, 0))
        pe_spec = pl.BlockSpec((1, ts, d_model), lambda t, b: (0, t, 0))
        out_shape = jax.ShapeDtypeStruct((batch, seq_len, d_model), x.dtype)
        dims = ("parallel", "parallel")                   # v7x: shard over both TensorCores

    compiler_params = pltpu.CompilerParams(dimension_semantics=dims)

    if dropout_p > 0.0:
        if key is None:
            key = jax.random.PRNGKey(0)
        # TODO(synk): on real TPUs the mask bits could be drawn on-chip with
        # pltpu.prng_seed / pltpu.prng_random_bits (saves one u32 HBM read per element),
        # but those primitives have no CPU/interpret lowering, so we precompute them.
        bits = jax.random.bits(key, xk.shape, dtype=jnp.uint32)
        threshold = min(int(round((1.0 - float(dropout_p)) * 4294967296.0)), 4294967295)
        scale = 1.0 / (1.0 - float(dropout_p))
        kernel = functools.partial(_add_pe_dropout_kernel, threshold=threshold, scale=scale)
        out = pl.pallas_call(
            kernel,
            out_shape=out_shape,
            grid=grid,
            in_specs=[x_spec, pe_spec, x_spec],           # bits tiled exactly like x
            out_specs=x_spec,
            compiler_params=compiler_params,
        )(xk, pek, bits)
    else:
        out = pl.pallas_call(
            _add_pe_kernel,
            out_shape=out_shape,
            grid=grid,
            in_specs=[x_spec, pe_spec],
            out_specs=x_spec,
            compiler_params=compiler_params,
        )(xk, pek)

    return out.reshape(batch, seq_len, d_model)


if __name__ == "__main__":
    # --- Case 1: small d_model (< 128) -> flattened lane-dense path -----------------
    d_model, max_len = 32, 64
    batch, seq_len = 2, 8
    dropout_rate = 0.1

    key = jax.random.PRNGKey(0)
    k_x, k_x2, k_drop = jax.random.split(key, 3)
    x = jax.random.normal(k_x, (batch, seq_len, d_model), dtype=jnp.float32)
    pe = make_positional_encoding_table(max_len, d_model)
    ref = x + pe[None, :seq_len, :]

    # Eval mode (dropout is identity): must match x + pe.
    out_eval = jax.block_until_ready(positional_encoding(x, pe, dropout_p=0.0))
    assert out_eval.shape == x.shape and out_eval.dtype == x.dtype
    assert jnp.allclose(out_eval, ref, atol=1e-6, rtol=1e-6)

    # Train mode: every element is either dropped (0) or scaled by 1/(1-p).
    out_train = jax.block_until_ready(
        positional_encoding(x, pe, dropout_p=dropout_rate, key=k_drop))
    assert out_train.shape == x.shape and out_train.dtype == x.dtype
    scaled = ref * jnp.float32(1.0 / (1.0 - dropout_rate))
    ok = (jnp.isclose(out_train, 0.0, atol=1e-6)
          | jnp.isclose(out_train, scaled, atol=1e-5, rtol=1e-5))
    assert bool(jnp.all(ok))

    # --- Case 2: wide d_model (>= 128) -> 3-D seq-tiled path -------------------------
    d_model2, max_len2 = 128, 32
    batch2, seq_len2 = 2, 16
    x2 = jax.random.normal(k_x2, (batch2, seq_len2, d_model2), dtype=jnp.float32)
    pe2 = make_positional_encoding_table(max_len2, d_model2)
    out2 = jax.block_until_ready(positional_encoding(x2, pe2, dropout_p=0.0))
    assert jnp.allclose(out2, x2 + pe2[None, :seq_len2, :], atol=1e-6, rtol=1e-6)

    print("KERNEL_OK")
</pallas_src>

<mosaic_0001>
module attributes {stable_mosaic.version = 11 : i64} {
  func.func @_add_pe_kernel(%arg0: i32, %arg1: memref<2x256xf32, #tpu.memory_space<vmem>>, %arg2: memref<1x256xf32, #tpu.memory_space<vmem>>, %arg3: memref<2x256xf32, #tpu.memory_space<vmem>>) attributes {dimension_semantics = [#tpu.dimension_semantics<parallel>], iteration_bounds = array<i64: 1>, scalar_prefetch = 0 : i64, scratch_operands = 0 : i64, tpu.core_type = #tpu.core_type<tc>, window_params = [{transform_indices = @transform_0, window_bounds = array<i64: 2, 256>}, {transform_indices = @transform_1, window_bounds = array<i64: 1, 256>}, {transform_indices = @transform_2, window_bounds = array<i64: 2, 256>}]} {
    %c0 = arith.constant 0 : index
    %c0_0 = arith.constant 0 : index
    %0 = vector.load %arg1[%c0, %c0_0] : memref<2x256xf32, #tpu.memory_space<vmem>>, vector<2x256xf32>
    %c0_1 = arith.constant 0 : index
    %c0_2 = arith.constant 0 : index
    %1 = vector.load %arg2[%c0_1, %c0_2] : memref<1x256xf32, #tpu.memory_space<vmem>>, vector<1x256xf32>
    %2 = vector.broadcast %1 : vector<1x256xf32> to vector<2x256xf32>
    %3 = arith.addf %0, %2 : vector<2x256xf32>
    %c0_3 = arith.constant 0 : index
    %c0_4 = arith.constant 0 : index
    %4 = vector.load %arg3[%c0_3, %c0_4] : memref<2x256xf32, #tpu.memory_space<vmem>>, vector<2x256xf32>
    tpu.vector_store %arg3[%c0_3, %c0_4], %3 {strides = array<i32>} : memref<2x256xf32, #tpu.memory_space<vmem>>, vector<2x256xf32>,
    return
  }
  func.func @transform_0(%arg0: i32) -> (i32, i32) {
    %c0_i32 = arith.constant 0 : i32
    %c0_i32_0 = arith.constant 0 : i32
    return %c0_i32, %arg0 : i32, i32
  }
  func.func @transform_1(%arg0: i32) -> (i32, i32) {
    %c0_i32 = arith.constant 0 : i32
    %c0_i32_0 = arith.constant 0 : i32
    return %c0_i32, %arg0 : i32, i32
  }
  func.func @transform_2(%arg0: i32) -> (i32, i32) {
    %c0_i32 = arith.constant 0 : i32
    %c0_i32_0 = arith.constant 0 : i32
    return %c0_i32, %arg0 : i32, i32
  }
}

</mosaic_0001>

<llo_original>
// kernel: tpu_custom_call.1
$region0: #{tpu_custom_call.1}
  #allocation0 [shape = 'u32[]', space=smem, size = 0x4, offset = 0x4, fixed_abs, tag = 'smem constant byte address 0x4 - core index']
  #allocation1 [shape = 'u32[144,128]{1,0:T(1,128)}', space=vmem, size = 0x12000, scoped, tag = 'internal scratch']
  %s0 = inlined_call_operand.hbm [shape: f32[2,256], index: 0, kind: input, shape index: {}]
  %s1 = inlined_call_operand.vmem [shape: f32[1,256], index: 1, kind: input, shape index: {}]
  %s2 = inlined_call_operand.hbm [shape: f32[2,256], index: 2, kind: output, shape index: {}]
  %s3 = sld [smem:[#allocation0]]
  $region22: #{tpu_custom_call.1} parent=0
    _
  %s5 = ssub.s32 1, %s3
  %s6 = scalar_select 0, %s5, %s3
  $region1: #{tpu_custom_call.1} parent=0
    #allocation2 [shape = 'u8[2048]{0}', space=vmem, size = 0x800, scoped, tag = 'input window, operand 0, single buffered']
    #allocation3 [shape = 's32[1]{0}', space=sflag, size = 0x4, scoped, tag = 'scoped memory for tpu_custom_call.1']
    #allocation4 [shape = 's32[1]{0}', space=sflag, size = 0x4, scoped, tag = 'scoped memory for tpu_custom_call.1']
    #allocation5 [shape = 'u8[2048]{0}', space=vmem, size = 0x800, scoped, tag = 'output window, operand 0, single buffered']
    %7 = vsyncpa [#allocation3], 0
    %8 = vsyncpa [#allocation4], 0
    // Predicated region
    $region2: #{tpu_custom_call.1} parent=1 // pred_check
      _
    $region3: #{tpu_custom_call.1} parent=1 // pred_check_branch
      %10 = sbr.rel (0) target = $region5
    $region4: #{tpu_custom_call.1} parent=1 // pred_region
      %s12 = ssub.s32 64, 64
      %13 = vsyncadd [#allocation3], %s12
      %s15 = sshll.u32 [#allocation2], 4
      %s16 = int_to_ptr.vmem [resolvable:$true] %s15
      %18 = dma.hbm_to_vmem [thread:$0]  %s0, 64, %s16, [#allocation3]
    $region5: #{tpu_custom_call.1} parent=1 // pred_fallthru
      _
    // Predicated region
    $region6: #{tpu_custom_call.1} parent=1 // pred_check
      _
    $region7: #{tpu_custom_call.1} parent=1 // pred_check_branch
      %20 = sbr.rel (0) target = $region9
    $region8: #{tpu_custom_call.1} parent=1 // pred_region
      _
    $region9: #{tpu_custom_call.1} parent=1 // pred_fallthru
      _
    // Predicated region
    $region10: #{tpu_custom_call.1} parent=1 // pred_check
      _
    $region11: #{tpu_custom_call.1} parent=1 // pred_check_branch
      %22 = sbr.rel (0) target = $region13
    $region12: #{tpu_custom_call.1} parent=1 // pred_region
      %23 = dma.done [#allocation3], 64
    $region13: #{tpu_custom_call.1} parent=1 // pred_fallthru
      _
    %v24 = vld [vmem:[#allocation2] sm:$0xf]
    %v25 = vld [vmem:[%s1] sm:$0x3]
    %v27 = vlaneseq
    %v28 = vshrl.u32 %v27, 7
    %v29 = vsub.s32 0, %v28
    %v30 = vrot.slane %v25, %v29
    %v31 = vlaneseq
    %v32 = vshrl.u32 %v31, 7
    %v33 = vsub.s32 1, %v32
    %v34 = vrot.slane %v25, %v33
    %v35 = vcombine.low %v30, %v34
    %v37 = vunpack.c.l.s4 1983009808
    %v38 = vunpack.c.0.s8 %v37
    %v39 = vlaneseq
    %v40 = vshrl.u32 %v39, 7
    %v41 = vsub.s32 %v38, %v40
    %v42 = vrot.slane %v35, %v41
    %v44 = vadd.f32 %v24, %v42
    %45 = vst [vmem:[#allocation5] sm:$0xf] %v44
    // Predicated region
    $region14: #{tpu_custom_call.1} parent=1 // pred_check
      _
    $region15: #{tpu_custom_call.1} parent=1 // pred_check_branch
      %47 = sbr.rel (0) target = $region17
    $region16: #{tpu_custom_call.1} parent=1 // pred_region
      %s49 = ssub.s32 64, 64
      %50 = vsyncadd [#allocation4], %s49
      %s52 = sshll.u32 [#allocation5], 4
      %s53 = int_to_ptr.vmem [resolvable:$true] %s52
      %55 = dma.vmem_to_hbm [thread:$0]  %s53, 64, %s2, [#allocation4]
    $region17: #{tpu_custom_call.1} parent=1 // pred_fallthru
      _
    // Predicated region
    $region18: #{tpu_custom_call.1} parent=1 // pred_check
      _
    $region19: #{tpu_custom_call.1} parent=1 // pred_check_branch
      %57 = sbr.rel (0) target = $region21
    $region20: #{tpu_custom_call.1} parent=1 // pred_region
      %58 = dma.done [#allocation4], 64
    $region21: #{tpu_custom_call.1} parent=1 // pred_fallthru
      _
    %59 = vsyncpa [#allocation3], 1
    %60 = vsyncpa [#allocation4], 1

</llo_original>
